<compile_context>
chip_gen: v6e
topology: v6e:2x2x1
jax: 0.10.0
libtpu: 0.0.40
codegen_flags: <defaults>
</compile_context>

<pallas_src>
import jax
import jax.numpy as jnp
import numpy as np
from jax.experimental import pallas as pl
from jax.experimental.pallas import tpu as pltpu

LN_EPS = 1e-6  # timm ViT norm epsilon


# ----------------------------------------------------------------------------
# Pallas kernel: fused (pos-embed add) -> LayerNorm -> decoder_pred Linear
# ----------------------------------------------------------------------------
def _fused_vit_head_kernel(x_ref, pos_ref, g_ref, beta_ref, w_ref, b_ref,
                           o_ref, xn_scr):
    # x_ref  : (TM, D)  activation rows (batch*token collapsed)
    # pos_ref: (TM, D)  positional-embedding rows aligned with x_ref
    # g_ref, beta_ref: (1, D) LayerNorm affine
    # w_ref  : (D, TN)  decoder_pred weight tile (bf16, zero-padded along N)
    # b_ref  : (1, TN)  decoder_pred bias tile (f32, zero-padded along N)
    # o_ref  : (TM, TN) output tile (lane-dense: TN is a multiple of 128)
    # xn_scr : (TM, D)  bf16 scratch caching normalized rows across N tiles

    @pl.when(pl.program_id(1) == 0)
    def _():
        x = x_ref[...].astype(jnp.float32) + pos_ref[...].astype(jnp.float32)
        # One-pass LayerNorm stats: mean and E[x^2] together (halves XLU work).
        inv_d = jnp.float32(1.0 / x.shape[-1])
        s = jnp.sum(x, axis=-1, keepdims=True)
        sq = jnp.sum(x * x, axis=-1, keepdims=True)
        mean = s * inv_d
        var = jnp.maximum(sq * inv_d - mean * mean, 0.0)
        xn = (x - mean) * jax.lax.rsqrt(var + LN_EPS)
        xn = xn * g_ref[...].astype(jnp.float32) + beta_ref[...].astype(jnp.float32)
        xn_scr[...] = xn.astype(jnp.bfloat16)

    # decoder_pred: bf16 operands, f32 accumulation on the MXU.
    y = jnp.dot(xn_scr[...], w_ref[...], preferred_element_type=jnp.float32)
    o_ref[...] = (y + b_ref[...]).astype(o_ref.dtype)


def fused_vit_head(latent, pos, gamma, beta, w, bias, *, target_tm=256):
    """latent: (B, L, D); pos: (L, D); gamma/beta: (D,); w: (D, P); bias: (P,)."""
    B, L, D = latent.shape
    P = w.shape[1]
    M = B * L

    # ---- M tiling: collapse batch+tokens, tile rows ------------------------
    if M <= target_tm:
        # Whole problem fits one tile; replicate pos across batch (cheap here).
        TM = M
        pos_arr = jnp.tile(pos, (B, 1)) if B > 1 else pos
    elif L % target_tm == 0:
        # Tiles never cross a batch boundary; pos block index is m mod (L/TM).
        TM = target_tm
        pos_arr = pos
    else:
        # Fallback: one batch element per tile (pos is grid-invariant).
        TM = L
        pos_arr = pos
    grid_m = M // TM
    pos_blocks = pos_arr.shape[0] // TM
    if pos_blocks == 1:
        pos_index = lambda m, n: (0, 0)
    else:
        pos_index = lambda m, n: (m % pos_blocks, 0)

    # ---- N tiling: pad P to a multiple of 128 (lane-dense stores) ----------
    P_pad = ((P + 127) // 128) * 128
    if P_pad <= 512:
        TN = P_pad
    elif P_pad % 512 == 0:
        TN = 512
    elif P_pad % 256 == 0:
        TN = 256
    else:
        TN = 128
    grid_n = P_pad // TN

    w_bf16 = jnp.zeros((D, P_pad), jnp.bfloat16).at[:, :P].set(
        w.astype(jnp.bfloat16))
    bias_pad = jnp.zeros((1, P_pad), jnp.float32).at[:, :P].set(
        bias.astype(jnp.float32))

    x2d = latent.reshape(M, D)
    gamma2 = gamma.reshape(1, D)
    beta2 = beta.reshape(1, D)

    out = pl.pallas_call(
        _fused_vit_head_kernel,
        out_shape=jax.ShapeDtypeStruct((M, P_pad), latent.dtype),
        grid_spec=pltpu.PrefetchScalarGridSpec(
            num_scalar_prefetch=0,
            grid=(grid_m, grid_n),
            in_specs=[
                pl.BlockSpec((TM, D), lambda m, n: (m, 0)),   # activation rows
                pl.BlockSpec((TM, D), pos_index),             # pos-embed rows
                pl.BlockSpec((1, D), lambda m, n: (0, 0)),    # LN gamma
                pl.BlockSpec((1, D), lambda m, n: (0, 0)),    # LN beta
                pl.BlockSpec((D, TN), lambda m, n: (0, n)),   # pred weight (bf16)
                pl.BlockSpec((1, TN), lambda m, n: (0, n)),   # pred bias
            ],
            out_specs=pl.BlockSpec((TM, TN), lambda m, n: (m, n)),
            scratch_shapes=[pltpu.VMEM((TM, D), jnp.bfloat16)],
        ),
        compiler_params=pltpu.CompilerParams(
            dimension_semantics=("parallel", "arbitrary"),
            vmem_limit_bytes=48 * 1024 * 1024),
    )(x2d, pos_arr, gamma2, beta2, w_bf16, bias_pad)

    return out[:, :P].reshape(B, L, P)


# ----------------------------------------------------------------------------
# Glue: unpatchify (pure layout op) and the module wrapper
# ----------------------------------------------------------------------------
def unpatchify(x, p, unpatchify_out_chans):
    """x: (B, L, p*p*C) with L = h*w  ->  imgs: (B, C, h*p, w*p) (NCHW)."""
    B, L, _ = x.shape
    h = w = int(round(L ** 0.5))
    assert h * w == L
    x = x.reshape(B, h, w, p, p, unpatchify_out_chans)
    x = jnp.einsum('nhwpqc->nchpwq', x)
    return x.reshape(B, unpatchify_out_chans, h * p, w * p)


class ViTTriplaneDecomposedPallas:
    """Synthetic, deterministic JAX/Pallas port of ViTTriplaneDecomposed.forward."""

    def __init__(self, embed_dim, num_tokens, patch_size, out_chans,
                 key, cls_token=False):
        self.cls_token = cls_token
        self.patch_size = patch_size
        self.unpatchify_out_chans = out_chans
        decoder_pred_size = patch_size ** 2 * out_chans

        k1, k2, k3 = jax.random.split(key, 3)
        # vit_decoder.pos_embed: nn.Parameter (zeros in __init__; random here so
        # the add path is actually exercised). Shape (1, L + 1, D) so the
        # cls_token=False branch's pos_embed[:, 1:] slice yields exactly L rows.
        self.pos_embed = 0.02 * jax.random.normal(
            k1, (1, num_tokens + 1, embed_dim), dtype=jnp.float32)
        # vit_decoder.norm (nn.LayerNorm default init)
        self.norm_gamma = jnp.ones((embed_dim,), jnp.float32)
        self.norm_beta = jnp.zeros((embed_dim,), jnp.float32)
        # decoder_pred = nn.Linear(embed_dim, decoder_pred_size, bias=True)
        lim = 1.0 / np.sqrt(embed_dim)
        self.pred_w = jax.random.uniform(
            k2, (embed_dim, decoder_pred_size), jnp.float32, -lim, lim)
        self.pred_b = jax.random.uniform(
            k3, (decoder_pred_size,), jnp.float32, -lim, lim)

    def forward(self, latent, c, img_size=None):
        # forward_vit_decoder: add pos-embed, (blocks -> TODO(synk)), final norm,
        # then decoder_pred — all fused in the Pallas kernel.
        if self.cls_token:
            pos = self.pos_embed[0]          # (L+1, D), latent carries a cls token
        else:
            pos = self.pos_embed[0, 1:]      # (L, D)
        # TODO(synk): vit_decoder.blocks (injected fusion/transformer blocks) skipped.
        pred = fused_vit_head(latent, pos, self.norm_gamma, self.norm_beta,
                              self.pred_w, self.pred_b)

        if self.cls_token:
            # Module returns the *normalized* D-dim cls token (pre decoder_pred);
            # recompute it for the single token in plain JAX (negligible cost).
            x0 = latent[:, :1] + pos[None, :1]
            mean = jnp.mean(x0, axis=-1, keepdims=True)
            var = jnp.mean(jnp.square(x0 - mean), axis=-1, keepdims=True)
            cls_tok = ((x0 - mean) * jax.lax.rsqrt(var + LN_EPS)
                       * self.norm_gamma + self.norm_beta)
            pred_img = pred[:, 1:]           # unpatchify drops the cls token
        else:
            cls_tok = None
            pred_img = pred

        imgs = unpatchify(pred_img, self.patch_size, self.unpatchify_out_chans)
        # TODO(synk): ret_dict = self.triplane_decoder(planes=imgs, c=c) — external
        # EG3D renderer, not replicated. We return the dict entries the module adds.
        ret_dict = {'latent': imgs, 'cls_token': cls_tok}
        return ret_dict


# Pure-JAX reference of the fused kernel for correctness checking (mirrors the
# bf16 matmul the kernel runs on the MXU; LN in f32).
def _reference_head(latent, pos, gamma, beta, w, bias):
    x = latent.astype(jnp.float32) + pos[None].astype(jnp.float32)
    mean = jnp.mean(x, axis=-1, keepdims=True)
    var = jnp.mean(jnp.square(x - mean), axis=-1, keepdims=True)
    xn = (x - mean) * jax.lax.rsqrt(var + LN_EPS)
    xn = xn * gamma + beta
    y = jnp.dot(xn.astype(jnp.bfloat16), w.astype(jnp.bfloat16),
                preferred_element_type=jnp.float32)
    return y + bias


if __name__ == "__main__":
    # Small, self-consistent shapes:
    #   B=2, tokens L = 8*8 = 64 (square, as unpatchify requires),
    #   embed_dim D = 32, patch_size p = 2,
    #   triplane out_chans = 3 planes * 4 channels = 12  ->  P = p*p*12 = 48.
    B, H, W, D = 2, 8, 8, 32
    L = H * W
    p = 2
    out_chans = 12

    key = jax.random.PRNGKey(0)
    k_mod, k_lat, k_c = jax.random.split(key, 3)

    model = ViTTriplaneDecomposedPallas(embed_dim=D, num_tokens=L,
                                        patch_size=p, out_chans=out_chans,
                                        key=k_mod, cls_token=False)

    latent = jax.random.normal(k_lat, (B, L, D), dtype=jnp.float32)
    c = jax.random.normal(k_c, (B, 25), dtype=jnp.float32)  # camera cond (unused)

    ret = model.forward(latent, c, img_size=H * p)
    imgs = jax.block_until_ready(ret['latent'])
    assert imgs.shape == (B, out_chans, H * p, W * p), imgs.shape

    # Cross-check kernel output against pure-JAX reference (demo shapes).
    pred_kernel = fused_vit_head(latent, model.pos_embed[0, 1:],
                                 model.norm_gamma, model.norm_beta,
                                 model.pred_w, model.pred_b)
    pred_ref = _reference_head(latent, model.pos_embed[0, 1:],
                               model.norm_gamma, model.norm_beta,
                               model.pred_w, model.pred_b)
    np.testing.assert_allclose(np.asarray(pred_kernel), np.asarray(pred_ref),
                               rtol=1e-2, atol=1e-2)

    # Second check exercising the tiled path (M > TM, pos indexed via modulo):
    B2, L2, D2, P2 = 2, 512, 128, 200
    kk = jax.random.split(jax.random.PRNGKey(1), 4)
    lat2 = jax.random.normal(kk[0], (B2, L2, D2), jnp.float32)
    pos2 = 0.02 * jax.random.normal(kk[1], (L2, D2), jnp.float32)
    w2 = jax.random.uniform(kk[2], (D2, P2), jnp.float32,
                            -1.0 / np.sqrt(D2), 1.0 / np.sqrt(D2))
    b2 = jax.random.uniform(kk[3], (P2,), jnp.float32,
                            -1.0 / np.sqrt(D2), 1.0 / np.sqrt(D2))
    g2 = jnp.ones((D2,), jnp.float32)
    be2 = jnp.zeros((D2,), jnp.float32)
    out_k = fused_vit_head(lat2, pos2, g2, be2, w2, b2)
    out_r = _reference_head(lat2, pos2, g2, be2, w2, b2)
    np.testing.assert_allclose(np.asarray(out_k), np.asarray(out_r),
                               rtol=1e-2, atol=1e-2)

    print("KERNEL_OK")
</pallas_src>

<mosaic_0001>
module attributes {stable_mosaic.version = 11 : i64} {
  func.func @_fused_vit_head_kernel(%arg0: i32, %arg1: i32, %arg2: memref<128x32xf32, #tpu.memory_space<vmem>>, %arg3: memref<128x32xf32, #tpu.memory_space<vmem>>, %arg4: memref<1x32xf32, #tpu.memory_space<vmem>>, %arg5: memref<1x32xf32, #tpu.memory_space<vmem>>, %arg6: memref<32x128xbf16, #tpu.memory_space<vmem>>, %arg7: memref<1x128xf32, #tpu.memory_space<vmem>>, %arg8: memref<128x128xf32, #tpu.memory_space<vmem>>, %arg9: memref<128x32xbf16, #tpu.memory_space<vmem>>) attributes {dimension_semantics = [#tpu.dimension_semantics<parallel>, #tpu.dimension_semantics<arbitrary>], iteration_bounds = array<i64: 1, 1>, scalar_prefetch = 0 : i64, scratch_operands = 1 : i64, tpu.core_type = #tpu.core_type<tc>, window_params = [{transform_indices = @transform_0, window_bounds = array<i64: 128, 32>}, {pipeline_mode = #tpu.pipeline_mode<synchronous>, transform_indices = @transform_1, window_bounds = array<i64: 128, 32>}, {pipeline_mode = #tpu.pipeline_mode<synchronous>, transform_indices = @transform_2, window_bounds = array<i64: 1, 32>}, {pipeline_mode = #tpu.pipeline_mode<synchronous>, transform_indices = @transform_3, window_bounds = array<i64: 1, 32>}, {transform_indices = @transform_4, window_bounds = array<i64: 32, 128>}, {transform_indices = @transform_5, window_bounds = array<i64: 1, 128>}, {transform_indices = @transform_6, window_bounds = array<i64: 128, 128>}]} {
    %c0_i32 = arith.constant 0 : i32
    %0 = arith.cmpi eq, %arg1, %c0_i32 : i32
    %1 = arith.extui %0 : i1 to i32
    %c0_i32_0 = arith.constant 0 : i32
    %2 = arith.cmpi ne, %1, %c0_i32_0 : i32
    scf.if %2 {
      %c0_8 = arith.constant 0 : index
      %c0_9 = arith.constant 0 : index
      %10 = vector.load %arg2[%c0_8, %c0_9] : memref<128x32xf32, #tpu.memory_space<vmem>>, vector<128x32xf32>
      %c0_10 = arith.constant 0 : index
      %c0_11 = arith.constant 0 : index
      %11 = vector.load %arg3[%c0_10, %c0_11] : memref<128x32xf32, #tpu.memory_space<vmem>>, vector<128x32xf32>
      %12 = arith.addf %10, %11 : vector<128x32xf32>
      %cst_12 = arith.constant dense<0.000000e+00> : vector<128xf32>
      %13 = vector.multi_reduction <add>, %12, %cst_12 [1] : vector<128x32xf32> to vector<128xf32>
      %14 = vector.shape_cast %13 : vector<128xf32> to vector<128x1xf32>
      %15 = arith.mulf %12, %12 : vector<128x32xf32>
      %cst_13 = arith.constant dense<0.000000e+00> : vector<128xf32>
      %16 = vector.multi_reduction <add>, %15, %cst_13 [1] : vector<128x32xf32> to vector<128xf32>
      %17 = vector.shape_cast %16 : vector<128xf32> to vector<128x1xf32>
      %cst_14 = arith.constant 3.125000e-02 : f32
      %18 = vector.broadcast %cst_14 : f32 to vector<128x1xf32>
      %19 = arith.mulf %14, %18 : vector<128x1xf32>
      %cst_15 = arith.constant 3.125000e-02 : f32
      %20 = vector.broadcast %cst_15 : f32 to vector<128x1xf32>
      %21 = arith.mulf %17, %20 : vector<128x1xf32>
      %22 = arith.mulf %19, %19 : vector<128x1xf32>
      %23 = arith.subf %21, %22 : vector<128x1xf32>
      %cst_16 = arith.constant 0.000000e+00 : f32
      %24 = vector.broadcast %cst_16 : f32 to vector<128x1xf32>
      %25 = arith.maximumf %23, %24 : vector<128x1xf32>
      %26 = vector.broadcast %19 : vector<128x1xf32> to vector<128x32xf32>
      %27 = arith.subf %12, %26 : vector<128x32xf32>
      %cst_17 = arith.constant 9.99999997E-7 : f32
      %28 = vector.broadcast %cst_17 : f32 to vector<128x1xf32>
      %29 = arith.addf %25, %28 : vector<128x1xf32>
      %30 = math.rsqrt %29 : vector<128x1xf32>
      %31 = vector.broadcast %30 : vector<128x1xf32> to vector<128x32xf32>
      %32 = arith.mulf %27, %31 : vector<128x32xf32>
      %c0_18 = arith.constant 0 : index
      %c0_19 = arith.constant 0 : index
      %33 = vector.load %arg4[%c0_18, %c0_19] : memref<1x32xf32, #tpu.memory_space<vmem>>, vector<1x32xf32>
      %34 = vector.broadcast %33 : vector<1x32xf32> to vector<128x32xf32>
      %35 = arith.mulf %32, %34 : vector<128x32xf32>
      %c0_20 = arith.constant 0 : index
      %c0_21 = arith.constant 0 : index
      %36 = vector.load %arg5[%c0_20, %c0_21] : memref<1x32xf32, #tpu.memory_space<vmem>>, vector<1x32xf32>
      %37 = vector.broadcast %36 : vector<1x32xf32> to vector<128x32xf32>
      %38 = arith.addf %35, %37 : vector<128x32xf32>
      %39 = arith.truncf %38 : vector<128x32xf32> to vector<128x32xbf16>
      %c0_22 = arith.constant 0 : index
      %c0_23 = arith.constant 0 : index
      %40 = vector.load %arg9[%c0_22, %c0_23] : memref<128x32xbf16, #tpu.memory_space<vmem>>, vector<128x32xbf16>
      tpu.vector_store %arg9[%c0_22, %c0_23], %39 {strides = array<i32>} : memref<128x32xbf16, #tpu.memory_space<vmem>>, vector<128x32xbf16>,
    } else {
    }
    %c0 = arith.constant 0 : index
    %c0_1 = arith.constant 0 : index
    %3 = vector.load %arg9[%c0, %c0_1] : memref<128x32xbf16, #tpu.memory_space<vmem>>, vector<128x32xbf16>
    %c0_2 = arith.constant 0 : index
    %c0_3 = arith.constant 0 : index
    %4 = vector.load %arg6[%c0_2, %c0_3] : memref<32x128xbf16, #tpu.memory_space<vmem>>, vector<32x128xbf16>
    %cst = arith.constant dense<0.000000e+00> : vector<128x128xf32>
    %5 = tpu.matmul %3, %4, %cst {dimension_numbers = #tpu.dot_dimension_numbers<[1], [0], [0], [1], [0, 0, 1, 1], [], []>} : vector<128x32xbf16>, vector<32x128xbf16>, vector<128x128xf32> -> vector<128x128xf32>
    %c0_4 = arith.constant 0 : index
    %c0_5 = arith.constant 0 : index
    %6 = vector.load %arg7[%c0_4, %c0_5] : memref<1x128xf32, #tpu.memory_space<vmem>>, vector<1x128xf32>
    %7 = vector.broadcast %6 : vector<1x128xf32> to vector<128x128xf32>
    %8 = arith.addf %5, %7 : vector<128x128xf32>
    %c0_6 = arith.constant 0 : index
    %c0_7 = arith.constant 0 : index
    %9 = vector.load %arg8[%c0_6, %c0_7] : memref<128x128xf32, #tpu.memory_space<vmem>>, vector<128x128xf32>
    tpu.vector_store %arg8[%c0_6, %c0_7], %8 {strides = array<i32>} : memref<128x128xf32, #tpu.memory_space<vmem>>, vector<128x128xf32>,
    return
  }
  func.func @transform_0(%arg0: i32, %arg1: i32) -> (i32, i32) {
    %c0_i32 = arith.constant 0 : i32
    %c0_i32_0 = arith.constant 0 : i32
    return %arg0, %c0_i32 : i32, i32
  }
  func.func @transform_1(%arg0: i32, %arg1: i32) -> (i32, i32) {
    %c0_i32 = arith.constant 0 : i32
    %c0_i32_0 = arith.constant 0 : i32
    %c0_i32_1 = arith.constant 0 : i32
    return %c0_i32, %c0_i32_0 : i32, i32
  }
  func.func @transform_2(%arg0: i32, %arg1: i32) -> (i32, i32) {
    %c0_i32 = arith.constant 0 : i32
    %c0_i32_0 = arith.constant 0 : i32
    %c0_i32_1 = arith.constant 0 : i32
    return %c0_i32, %c0_i32_0 : i32, i32
  }
  func.func @transform_3(%arg0: i32, %arg1: i32) -> (i32, i32) {
    %c0_i32 = arith.constant 0 : i32
    %c0_i32_0 = arith.constant 0 : i32
    %c0_i32_1 = arith.constant 0 : i32
    return %c0_i32, %c0_i32_0 : i32, i32
  }
  func.func @transform_4(%arg0: i32, %arg1: i32) -> (i32, i32) {
    %c0_i32 = arith.constant 0 : i32
    %c0_i32_0 = arith.constant 0 : i32
    return %c0_i32, %arg1 : i32, i32
  }
  func.func @transform_5(%arg0: i32, %arg1: i32) -> (i32, i32) {
    %c0_i32 = arith.constant 0 : i32
    %c0_i32_0 = arith.constant 0 : i32
    return %c0_i32, %arg1 : i32, i32
  }
  func.func @transform_6(%arg0: i32, %arg1: i32) -> (i32, i32) {
    %c0_i32 = arith.constant 0 : i32
    return %arg0, %arg1 : i32, i32
  }
}

</mosaic_0001>

<llo_original>
// kernel: tpu_custom_call.1
$region0: #{tpu_custom_call.1}
  #allocation0 [shape = 'u32[]', space=smem, size = 0x4, offset = 0x4, fixed_abs, tag = 'smem constant byte address 0x4 - core index']
  #allocation1 [shape = 'u32[144,128]{1,0:T(1,128)}', space=vmem, size = 0x12000, scoped, tag = 'internal scratch']
  #allocation2 [shape = 'bf16[128,32]{1,0:T(8,128)(2,1)}', space=vmem, size = 0x8000, scoped, tag = 'scratch operand']
  %s0 = inlined_call_operand.vmem [shape: f32[128,32], index: 0, kind: input, shape index: {}]
  %s1 = inlined_call_operand.vmem [shape: f32[128,32], index: 1, kind: input, shape index: {}]
  %s2 = inlined_call_operand.vmem [shape: f32[1,32], index: 2, kind: input, shape index: {}]
  %s3 = inlined_call_operand.vmem [shape: f32[1,32], index: 3, kind: input, shape index: {}]
  %s4 = inlined_call_operand.vmem [shape: bf16[32,128], index: 4, kind: input, shape index: {}]
  %s5 = inlined_call_operand.vmem [shape: f32[1,128], index: 5, kind: input, shape index: {}]
  %s6 = inlined_call_operand.hbm [shape: f32[128,128], index: 6, kind: output, shape index: {}]
  %s7 = sld [smem:[#allocation0]]
  $region38: #{tpu_custom_call.1} parent=0
    _
  %s9 = ssub.s32 1, %s7
  %s10 = scalar_select 0, %s9, %s7
  $region1: #{tpu_custom_call.1} parent=0
    #allocation3 [shape = 'u8[65536]{0}', space=vmem, size = 0x10000, scoped, tag = 'output window, operand 0, single buffered']
    #allocation4 [shape = 's32[1]{0}', space=sflag, size = 0x4, scoped, tag = 'scoped memory for tpu_custom_call.1']
    %11 = vsyncpa [#allocation4], 0
    // Predicated region
    $region2: #{tpu_custom_call.1} parent=1 // pred_check
      _
    $region3: #{tpu_custom_call.1} parent=1 // pred_check_branch
      %13 = sbr.rel (0) target = $region5
    $region4: #{tpu_custom_call.1} parent=1 // pred_region
      _
    $region5: #{tpu_custom_call.1} parent=1 // pred_fallthru
      _
    // Predicated region
    $region6: #{tpu_custom_call.1} parent=1 // pred_check
      _
    $region7: #{tpu_custom_call.1} parent=1 // pred_check_branch
      %15 = sbr.rel (0) target = $region9
    $region8: #{tpu_custom_call.1} parent=1 // pred_region
      _
    $region9: #{tpu_custom_call.1} parent=1 // pred_fallthru
      _
    // Predicated region
    $region10: #{tpu_custom_call.1} parent=1 // pred_check
      _
    $region11: #{tpu_custom_call.1} parent=1 // pred_check_branch
      %17 = sbr.rel (0) target = $region13
    $region12: #{tpu_custom_call.1} parent=1 // pred_region
      _
    $region13: #{tpu_custom_call.1} parent=1 // pred_fallthru
      _
    // Predicated region
    $region14: #{tpu_custom_call.1} parent=1 // pred_check
      _
    $region15: #{tpu_custom_call.1} parent=1 // pred_check_branch
      %19 = sbr.rel (0) target = $region17
    $region16: #{tpu_custom_call.1} parent=1 // pred_region
      _
    $region17: #{tpu_custom_call.1} parent=1 // pred_fallthru
      _
    // Predicated region
    $region18: #{tpu_custom_call.1} parent=1 // pred_check
      _
    $region19: #{tpu_custom_call.1} parent=1 // pred_check_branch
      %21 = sbr.rel (0) target = $region21
    $region20: #{tpu_custom_call.1} parent=1 // pred_region
      _
    $region21: #{tpu_custom_call.1} parent=1 // pred_fallthru
      _
    // Predicated region
    $region22: #{tpu_custom_call.1} parent=1 // pred_check
      _
    $region23: #{tpu_custom_call.1} parent=1 // pred_check_branch
      %23 = sbr.rel (0) target = $region25
    $region24: #{tpu_custom_call.1} parent=1 // pred_region
      _
    $region25: #{tpu_custom_call.1} parent=1 // pred_fallthru
      _
    %p25 = scmp.eq.s32.totalorder 0, 0
    // Predicated region
    $region26: #{tpu_custom_call.1} parent=1 // pred_check
      %p26 = pneg %p25
    $region27: #{tpu_custom_call.1} parent=1 // pred_check_branch
      %28 = sbr.rel (%p26) target = $region29
    $region28: #{tpu_custom_call.1} parent=1 // pred_region
      %v29 = vld [vmem:[%s0] sm:$0xff]
      %v30 = vld [vmem:[%s0 + $0x8] sm:$0xff]
      %v31 = vld [vmem:[%s0 + $0x10] sm:$0xff]
      %v32 = vld [vmem:[%s0 + $0x18] sm:$0xff]
      %v33 = vld [vmem:[%s0 + $0x20] sm:$0xff]
      %v34 = vld [vmem:[%s0 + $0x28] sm:$0xff]
      %v35 = vld [vmem:[%s0 + $0x30] sm:$0xff]
      %v36 = vld [vmem:[%s0 + $0x38] sm:$0xff]
      %v37 = vld [vmem:[%s0 + $0x40] sm:$0xff]
      %v38 = vld [vmem:[%s0 + $0x48] sm:$0xff]
      %v39 = vld [vmem:[%s0 + $0x50] sm:$0xff]
      %v40 = vld [vmem:[%s0 + $0x58] sm:$0xff]
      %v41 = vld [vmem:[%s0 + $0x60] sm:$0xff]
      %v42 = vld [vmem:[%s0 + $0x68] sm:$0xff]
      %v43 = vld [vmem:[%s0 + $0x70] sm:$0xff]
      %v44 = vld [vmem:[%s0 + $0x78] sm:$0xff]
      %v45 = vld [vmem:[%s1] sm:$0xff]
      %v46 = vld [vmem:[%s1 + $0x8] sm:$0xff]
      %v47 = vld [vmem:[%s1 + $0x10] sm:$0xff]
      %v48 = vld [vmem:[%s1 + $0x18] sm:$0xff]
      %v49 = vld [vmem:[%s1 + $0x20] sm:$0xff]
      %v50 = vld [vmem:[%s1 + $0x28] sm:$0xff]
      %v51 = vld [vmem:[%s1 + $0x30] sm:$0xff]
      %v52 = vld [vmem:[%s1 + $0x38] sm:$0xff]
      %v53 = vld [vmem:[%s1 + $0x40] sm:$0xff]
      %v54 = vld [vmem:[%s1 + $0x48] sm:$0xff]
      %v55 = vld [vmem:[%s1 + $0x50] sm:$0xff]
      %v56 = vld [vmem:[%s1 + $0x58] sm:$0xff]
      %v57 = vld [vmem:[%s1 + $0x60] sm:$0xff]
      %v58 = vld [vmem:[%s1 + $0x68] sm:$0xff]
      %v59 = vld [vmem:[%s1 + $0x70] sm:$0xff]
      %v60 = vld [vmem:[%s1 + $0x78] sm:$0xff]
      %v61 = vadd.f32 %v29, %v45
      %v62 = vadd.f32 %v30, %v46
      %v63 = vadd.f32 %v31, %v47
      %v64 = vadd.f32 %v32, %v48
      %v65 = vadd.f32 %v33, %v49
      %v66 = vadd.f32 %v34, %v50
      %v67 = vadd.f32 %v35, %v51
      %v68 = vadd.f32 %v36, %v52
      %v69 = vadd.f32 %v37, %v53
      %v70 = vadd.f32 %v38, %v54
      %v71 = vadd.f32 %v39, %v55
      %v72 = vadd.f32 %v40, %v56
      %v73 = vadd.f32 %v41, %v57
      %v74 = vadd.f32 %v42, %v58
      %v75 = vadd.f32 %v43, %v59
      %v76 = vadd.f32 %v44, %v60
      %vm77 = vcmask 261120
      %v78 = vsel %vm77, %v61, 0.0
      %79 = vadd.xlane.f32.xlu0 %v78
      %v80 = vpop.xlane.xlu0 %79
      %v81 = vsel %vm77, %v62, 0.0
      %82 = vadd.xlane.f32.xlu0 %v81
      %v83 = vpop.xlane.xlu0 %82
      %v84 = vsel %vm77, %v63, 0.0
      %85 = vadd.xlane.f32.xlu0 %v84
      %v86 = vpop.xlane.xlu0 %85
      %v87 = vsel %vm77, %v64, 0.0
      %88 = vadd.xlane.f32.xlu0 %v87
      %v89 = vpop.xlane.xlu0 %88
      %v90 = vsel %vm77, %v65, 0.0
      %91 = vadd.xlane.f32.xlu0 %v90
      %v92 = vpop.xlane.xlu0 %91
      %v93 = vsel %vm77, %v66, 0.0
      %94 = vadd.xlane.f32.xlu0 %v93
      %v95 = vpop.xlane.xlu0 %94
      %v96 = vsel %vm77, %v67, 0.0
      %97 = vadd.xlane.f32.xlu0 %v96
      %v98 = vpop.xlane.xlu0 %97
      %v99 = vsel %vm77, %v68, 0.0
      %100 = vadd.xlane.f32.xlu0 %v99
      %v101 = vpop.xlane.xlu0 %100
      %v102 = vsel %vm77, %v69, 0.0
      %103 = vadd.xlane.f32.xlu0 %v102
      %v104 = vpop.xlane.xlu0 %103
      %v105 = vsel %vm77, %v70, 0.0
      %106 = vadd.xlane.f32.xlu0 %v105
      %v107 = vpop.xlane.xlu0 %106
      %v108 = vsel %vm77, %v71, 0.0
      %109 = vadd.xlane.f32.xlu0 %v108
      %v110 = vpop.xlane.xlu0 %109
      %v111 = vsel %vm77, %v72, 0.0
      %112 = vadd.xlane.f32.xlu0 %v111
      %v113 = vpop.xlane.xlu0 %112
      %v114 = vsel %vm77, %v73, 0.0
      %115 = vadd.xlane.f32.xlu0 %v114
      %v116 = vpop.xlane.xlu0 %115
      %v117 = vsel %vm77, %v74, 0.0
      %118 = vadd.xlane.f32.xlu0 %v117
      %v119 = vpop.xlane.xlu0 %118
      %v120 = vsel %vm77, %v75, 0.0
      %121 = vadd.xlane.f32.xlu0 %v120
      %v122 = vpop.xlane.xlu0 %121
      %v123 = vsel %vm77, %v76, 0.0
      %124 = vadd.xlane.f32.xlu0 %v123
      %v125 = vpop.xlane.xlu0 %124
      %v126 = vmul.f32 %v61, %v61
      %v127 = vmul.f32 %v62, %v62
      %v128 = vmul.f32 %v63, %v63
      %v129 = vmul.f32 %v64, %v64
      %v130 = vmul.f32 %v65, %v65
      %v131 = vmul.f32 %v66, %v66
      %v132 = vmul.f32 %v67, %v67
      %v133 = vmul.f32 %v68, %v68
      %v134 = vmul.f32 %v69, %v69
      %v135 = vmul.f32 %v70, %v70
      %v136 = vmul.f32 %v71, %v71
      %v137 = vmul.f32 %v72, %v72
      %v138 = vmul.f32 %v73, %v73
      %v139 = vmul.f32 %v74, %v74
      %v140 = vmul.f32 %v75, %v75
      %v141 = vmul.f32 %v76, %v76
      %v142 = vsel %vm77, %v126, 0.0
      %143 = vadd.xlane.f32.xlu0 %v142
      %v144 = vpop.xlane.xlu0 %143
      %v145 = vsel %vm77, %v127, 0.0
      %146 = vadd.xlane.f32.xlu0 %v145
      %v147 = vpop.xlane.xlu0 %146
      %v148 = vsel %vm77, %v128, 0.0
      %149 = vadd.xlane.f32.xlu0 %v148
      %v150 = vpop.xlane.xlu0 %149
      %v151 = vsel %vm77, %v129, 0.0
      %152 = vadd.xlane.f32.xlu0 %v151
      %v153 = vpop.xlane.xlu0 %152
      %v154 = vsel %vm77, %v130, 0.0
      %155 = vadd.xlane.f32.xlu0 %v154
      %v156 = vpop.xlane.xlu0 %155
      %v157 = vsel %vm77, %v131, 0.0
      %158 = vadd.xlane.f32.xlu0 %v157
      %v159 = vpop.xlane.xlu0 %158
      %v160 = vsel %vm77, %v132, 0.0
      %161 = vadd.xlane.f32.xlu0 %v160
      %v162 = vpop.xlane.xlu0 %161
      %v163 = vsel %vm77, %v133, 0.0
      %164 = vadd.xlane.f32.xlu0 %v163
      %v165 = vpop.xlane.xlu0 %164
      %v166 = vsel %vm77, %v134, 0.0
      %167 = vadd.xlane.f32.xlu0 %v166
      %v168 = vpop.xlane.xlu0 %167
      %v169 = vsel %vm77, %v135, 0.0
      %170 = vadd.xlane.f32.xlu0 %v169
      %v171 = vpop.xlane.xlu0 %170
      %v172 = vsel %vm77, %v136, 0.0
      %173 = vadd.xlane.f32.xlu0 %v172
      %v174 = vpop.xlane.xlu0 %173
      %v175 = vsel %vm77, %v137, 0.0
      %176 = vadd.xlane.f32.xlu0 %v175
      %v177 = vpop.xlane.xlu0 %176
      %v178 = vsel %vm77, %v138, 0.0
      %179 = vadd.xlane.f32.xlu0 %v178
      %v180 = vpop.xlane.xlu0 %179
      %v181 = vsel %vm77, %v139, 0.0
      %182 = vadd.xlane.f32.xlu0 %v181
      %v183 = vpop.xlane.xlu0 %182
      %v184 = vsel %vm77, %v140, 0.0
      %185 = vadd.xlane.f32.xlu0 %v184
      %v186 = vpop.xlane.xlu0 %185
      %v187 = vsel %vm77, %v141, 0.0
      %188 = vadd.xlane.f32.xlu0 %v187
      %v189 = vpop.xlane.xlu0 %188
      %v190 = vmul.f32 %v80, 0.03125
      %v191 = vmul.f32 %v83, 0.03125
      %v192 = vmul.f32 %v86, 0.03125
      %v193 = vmul.f32 %v89, 0.03125
      %v194 = vmul.f32 %v92, 0.03125
      %v195 = vmul.f32 %v95, 0.03125
      %v196 = vmul.f32 %v98, 0.03125
      %v197 = vmul.f32 %v101, 0.03125
      %v198 = vmul.f32 %v104, 0.03125
      %v199 = vmul.f32 %v107, 0.03125
      %v200 = vmul.f32 %v110, 0.03125
      %v201 = vmul.f32 %v113, 0.03125
      %v202 = vmul.f32 %v116, 0.03125
      %v203 = vmul.f32 %v119, 0.03125
      %v204 = vmul.f32 %v122, 0.03125
      %v205 = vmul.f32 %v125, 0.03125
      %v206 = vmul.f32 %v144, 0.03125
      %v207 = vmul.f32 %v147, 0.03125
      %v208 = vmul.f32 %v150, 0.03125
      %v209 = vmul.f32 %v153, 0.03125
      %v210 = vmul.f32 %v156, 0.03125
      %v211 = vmul.f32 %v159, 0.03125
      %v212 = vmul.f32 %v162, 0.03125
      %v213 = vmul.f32 %v165, 0.03125
      %v214 = vmul.f32 %v168, 0.03125
      %v215 = vmul.f32 %v171, 0.03125
      %v216 = vmul.f32 %v174, 0.03125
      %v217 = vmul.f32 %v177, 0.03125
      %v218 = vmul.f32 %v180, 0.03125
      %v219 = vmul.f32 %v183, 0.03125
      %v220 = vmul.f32 %v186, 0.03125
      %v221 = vmul.f32 %v189, 0.03125
      %v222 = vmul.f32 %v190, %v190
      %v223 = vmul.f32 %v191, %v191
      %v224 = vmul.f32 %v192, %v192
      %v225 = vmul.f32 %v193, %v193
      %v226 = vmul.f32 %v194, %v194
      %v227 = vmul.f32 %v195, %v195
      %v228 = vmul.f32 %v196, %v196
      %v229 = vmul.f32 %v197, %v197
      %v230 = vmul.f32 %v198, %v198
      %v231 = vmul.f32 %v199, %v199
      %v232 = vmul.f32 %v200, %v200
      %v233 = vmul.f32 %v201, %v201
      %v234 = vmul.f32 %v202, %v202
      %v235 = vmul.f32 %v203, %v203
      %v236 = vmul.f32 %v204, %v204
      %v237 = vmul.f32 %v205, %v205
      %v238 = vsub.f32 %v206, %v222
      %v239 = vsub.f32 %v207, %v223
      %v240 = vsub.f32 %v208, %v224
      %v241 = vsub.f32 %v209, %v225
      %v242 = vsub.f32 %v210, %v226
      %v243 = vsub.f32 %v211, %v227
      %v244 = vsub.f32 %v212, %v228
      %v245 = vsub.f32 %v213, %v229
      %v246 = vsub.f32 %v214, %v230
      %v247 = vsub.f32 %v215, %v231
      %v248 = vsub.f32 %v216, %v232
      %v249 = vsub.f32 %v217, %v233
      %v250 = vsub.f32 %v218, %v234
      %v251 = vsub.f32 %v219, %v235
      %v252 = vsub.f32 %v220, %v236
      %v253 = vsub.f32 %v221, %v237
      %v254 = vmax.f32 %v238, 0.0
      %v255 = vmax.f32 %v239, 0.0
      %v256 = vmax.f32 %v240, 0.0
      %v257 = vmax.f32 %v241, 0.0
      %v258 = vmax.f32 %v242, 0.0
      %v259 = vmax.f32 %v243, 0.0
      %v260 = vmax.f32 %v244, 0.0
      %v261 = vmax.f32 %v245, 0.0
      %v262 = vmax.f32 %v246, 0.0
      %v263 = vmax.f32 %v247, 0.0
      %v264 = vmax.f32 %v248, 0.0
      %v265 = vmax.f32 %v249, 0.0
      %v266 = vmax.f32 %v250, 0.0
      %v267 = vmax.f32 %v251, 0.0
      %v268 = vmax.f32 %v252, 0.0
      %v269 = vmax.f32 %v253, 0.0
      %v270 = vsub.f32 %v61, %v190
      %v271 = vsub.f32 %v62, %v191
      %v272 = vsub.f32 %v63, %v192
      %v273 = vsub.f32 %v64, %v193
      %v274 = vsub.f32 %v65, %v194
      %v275 = vsub.f32 %v66, %v195
      %v276 = vsub.f32 %v67, %v196
      %v277 = vsub.f32 %v68, %v197
      %v278 = vsub.f32 %v69, %v198
      %v279 = vsub.f32 %v70, %v199
      %v280 = vsub.f32 %v71, %v200
      %v281 = vsub.f32 %v72, %v201
      %v282 = vsub.f32 %v73, %v202
      %v283 = vsub.f32 %v74, %v203
      %v284 = vsub.f32 %v75, %v204
      %v285 = vsub.f32 %v76, %v205
      %v286 = vadd.f32 %v254, 1e-06
      %v287 = vadd.f32 %v255, 1e-06
      %v288 = vadd.f32 %v256, 1e-06
      %v289 = vadd.f32 %v257, 1e-06
      %v290 = vadd.f32 %v258, 1e-06
      %v291 = vadd.f32 %v259, 1e-06
      %v292 = vadd.f32 %v260, 1e-06
      %v293 = vadd.f32 %v261, 1e-06
      %v294 = vadd.f32 %v262, 1e-06
      %v295 = vadd.f32 %v263, 1e-06
      %v296 = vadd.f32 %v264, 1e-06
      %v297 = vadd.f32 %v265, 1e-06
      %v298 = vadd.f32 %v266, 1e-06
      %v299 = vadd.f32 %v267, 1e-06
      %v300 = vadd.f32 %v268, 1e-06
      %v301 = vadd.f32 %v269, 1e-06
      %v302 = vrsqrt.pop %v286
      %v303 = vrsqrt.pop %v287
      %v304 = vrsqrt.pop %v288
      %v305 = vrsqrt.pop %v289
      %v306 = vrsqrt.pop %v290
      %v307 = vrsqrt.pop %v291
      %v308 = vrsqrt.pop %v292
      %v309 = vrsqrt.pop %v293
      %v310 = vrsqrt.pop %v294
      %v311 = vrsqrt.pop %v295
      %v312 = vrsqrt.pop %v296
      %v313 = vrsqrt.pop %v297
      %v314 = vrsqrt.pop %v298
      %v315 = vrsqrt.pop %v299
      %v316 = vrsqrt.pop %v300
      %v317 = vrsqrt.pop %v301
      %v318 = vmul.f32 %v270, %v302
      %v319 = vmul.f32 %v271, %v303
      %v320 = vmul.f32 %v272, %v304
      %v321 = vmul.f32 %v273, %v305
      %v322 = vmul.f32 %v274, %v306
      %v323 = vmul.f32 %v275, %v307
      %v324 = vmul.f32 %v276, %v308
      %v325 = vmul.f32 %v277, %v309
      %v326 = vmul.f32 %v278, %v310
      %v327 = vmul.f32 %v279, %v311
      %v328 = vmul.f32 %v280, %v312
      %v329 = vmul.f32 %v281, %v313
      %v330 = vmul.f32 %v282, %v314
      %v331 = vmul.f32 %v283, %v315
      %v332 = vmul.f32 %v284, %v316
      %v333 = vmul.f32 %v285, %v317
      %v334 = vld [vmem:[%s2] sm:$0x1]
      %v336 = vlaneseq
      %v337 = vshrl.u32 %v336, 7
      %v338 = vsub.s32 0, %v337
      %v339 = vrot.slane %v334, %v338
      %v341 = vmul.f32 %v318, %v339
      %v342 = vmul.f32 %v319, %v339
      %v343 = vmul.f32 %v320, %v339
      %v344 = vmul.f32 %v321, %v339
      %v345 = vmul.f32 %v322, %v339
      %v346 = vmul.f32 %v323, %v339
      %v347 = vmul.f32 %v324, %v339
      %v348 = vmul.f32 %v325, %v339
      %v349 = vmul.f32 %v326, %v339
      %v350 = vmul.f32 %v327, %v339
      %v351 = vmul.f32 %v328, %v339
      %v352 = vmul.f32 %v329, %v339
      %v353 = vmul.f32 %v330, %v339
      %v354 = vmul.f32 %v331, %v339
      %v355 = vmul.f32 %v332, %v339
      %v356 = vmul.f32 %v333, %v339
      %v357 = vld [vmem:[%s3] sm:$0x1]
      %v359 = vlaneseq
      %v360 = vshrl.u32 %v359, 7
      %v361 = vsub.s32 0, %v360
      %v362 = vrot.slane %v357, %v361
      %v364 = vadd.f32 %v341, %v362
      %v365 = vadd.f32 %v342, %v362
      %v366 = vadd.f32 %v343, %v362
      %v367 = vadd.f32 %v344, %v362
      %v368 = vadd.f32 %v345, %v362
      %v369 = vadd.f32 %v346, %v362
      %v370 = vadd.f32 %v347, %v362
      %v371 = vadd.f32 %v348, %v362
      %v372 = vadd.f32 %v349, %v362
      %v373 = vadd.f32 %v350, %v362
      %v374 = vadd.f32 %v351, %v362
      %v375 = vadd.f32 %v352, %v362
      %v376 = vadd.f32 %v353, %v362
      %v377 = vadd.f32 %v354, %v362
      %v378 = vadd.f32 %v355, %v362
      %v379 = vadd.f32 %v356, %v362
      %v380 = vpack.c.bf16 %v365, %v364
      %v381 = vpack.c.bf16 %v367, %v366
      %v382 = vpack.c.bf16 %v369, %v368
      %v383 = vpack.c.bf16 %v371, %v370
      %v384 = vpack.c.bf16 %v373, %v372
      %v385 = vpack.c.bf16 %v375, %v374
      %v386 = vpack.c.bf16 %v377, %v376
      %v387 = vpack.c.bf16 %v379, %v378
      %v396 = vunpack.c.l.b16 %v380
      %v397 = vunpack.c.h.b16 %v380
      %v398 = vunpack.c.l.b16 %v381
      %v399 = vunpack.c.h.b16 %v381
      %v400 = vunpack.c.l.b16 %v382
      %v401 = vunpack.c.h.b16 %v382
      %v402 = vunpack.c.l.b16 %v383
      %v403 = vunpack.c.h.b16 %v383
      %v404 = vunpack.c.l.b16 %v384
      %v405 = vunpack.c.h.b16 %v384
      %v406 = vunpack.c.l.b16 %v385
      %v407 = vunpack.c.h.b16 %v385
      %v408 = vunpack.c.l.b16 %v386
      %v409 = vunpack.c.h.b16 %v386
      %v410 = vunpack.c.l.b16 %v387
      %v411 = vunpack.c.h.b16 %v387
      %v412 = vpack.c.b16 %v396, %v396
      %v413 = vpack.c.b16 %v397, %v397
      %v414 = vpack.c.b16 %v398, %v398
      %v415 = vpack.c.b16 %v399, %v399
      %v416 = vpack.c.b16 %v400, %v400
      %v417 = vpack.c.b16 %v401, %v401
      %v418 = vpack.c.b16 %v402, %v402
      %v419 = vpack.c.b16 %v403, %v403
      %v420 = vpack.c.b16 %v404, %v404
      %v421 = vpack.c.b16 %v405, %v405
      %v422 = vpack.c.b16 %v406, %v406
      %v423 = vpack.c.b16 %v407, %v407
      %v424 = vpack.c.b16 %v408, %v408
      %v425 = vpack.c.b16 %v409, %v409
      %v426 = vpack.c.b16 %v410, %v410
      %v427 = vpack.c.b16 %v411, %v411
      %vm444 = vcmask 257024
      %445 = vst.msk [vmem:[#allocation2] sm:$0xf] %vm444, %v412
      %446 = vst.msk [vmem:[#allocation2 + $0x4] sm:$0xf] %vm444, %v413
      %447 = vst.msk [vmem:[#allocation2 + $0x8] sm:$0xf] %vm444, %v414
      %448 = vst.msk [vmem:[#allocation2 + $0xc] sm:$0xf] %vm444, %v415
      %449 = vst.msk [vmem:[#allocation2 + $0x10] sm:$0xf] %vm444, %v416
      %450 = vst.msk [vmem:[#allocation2 + $0x14] sm:$0xf] %vm444, %v417
      %451 = vst.msk [vmem:[#allocation2 + $0x18] sm:$0xf] %vm444, %v418
      %452 = vst.msk [vmem:[#allocation2 + $0x1c] sm:$0xf] %vm444, %v419
      %453 = vst.msk [vmem:[#allocation2 + $0x20] sm:$0xf] %vm444, %v420
      %454 = vst.msk [vmem:[#allocation2 + $0x24] sm:$0xf] %vm444, %v421
      %455 = vst.msk [vmem:[#allocation2 + $0x28] sm:$0xf] %vm444, %v422
      %456 = vst.msk [vmem:[#allocation2 + $0x2c] sm:$0xf] %vm444, %v423
      %457 = vst.msk [vmem:[#allocation2 + $0x30] sm:$0xf] %vm444, %v424
      %458 = vst.msk [vmem:[#allocation2 + $0x34] sm:$0xf] %vm444, %v425
      %459 = vst.msk [vmem:[#allocation2 + $0x38] sm:$0xf] %vm444, %v426
      %460 = vst.msk [vmem:[#allocation2 + $0x3c] sm:$0xf] %vm444, %v427
    $region29: #{tpu_custom_call.1} parent=1 // pred_fallthru
      _
    %v461 = vld [vmem:[#allocation2] sm:$0xf]
    %v462 = vld [vmem:[#allocation2 + $0x4] sm:$0xf]
    %v463 = vld [vmem:[#allocation2 + $0x8] sm:$0xf]
    %v464 = vld [vmem:[#allocation2 + $0xc] sm:$0xf]
    %v465 = vld [vmem:[#allocation2 + $0x10] sm:$0xf]
    %v466 = vld [vmem:[#allocation2 + $0x14] sm:$0xf]
    %v467 = vld [vmem:[#allocation2 + $0x18] sm:$0xf]
    %v468 = vld [vmem:[#allocation2 + $0x1c] sm:$0xf]
    %v469 = vld [vmem:[#allocation2 + $0x20] sm:$0xf]
    %v470 = vld [vmem:[#allocation2 + $0x24] sm:$0xf]
    %v471 = vld [vmem:[#allocation2 + $0x28] sm:$0xf]
    %v472 = vld [vmem:[#allocation2 + $0x2c] sm:$0xf]
    %v473 = vld [vmem:[#allocation2 + $0x30] sm:$0xf]
    %v474 = vld [vmem:[#allocation2 + $0x34] sm:$0xf]
    %v475 = vld [vmem:[#allocation2 + $0x38] sm:$0xf]
    %v476 = vld [vmem:[#allocation2 + $0x3c] sm:$0xf]
    %v477 = vld [vmem:[%s4] sm:$0xf]
    %v478 = vld [vmem:[%s4 + $0x4] sm:$0xf]
    %v479 = vld [vmem:[%s4 + $0x8] sm:$0xf]
    %v480 = vld [vmem:[%s4 + $0xc] sm:$0xf]
    %v481 = vld [vmem:[%s5] sm:$0x1]
    %v483 = vlaneseq
    %v484 = vshrl.u32 %v483, 7
    %v485 = vsub.s32 0, %v484
    %v486 = vrot.slane %v481, %v485
    %v504 = vunpack.c.l.b16 %v461
    %v505 = vunpack.c.l.b16 %v462
    %v506 = vunpack.c.l.b16 %v463
    %v507 = vunpack.c.l.b16 %v464
    %v508 = vunpack.c.l.b16 %v465
    %v509 = vunpack.c.l.b16 %v466
    %v510 = vunpack.c.l.b16 %v467
    %v511 = vunpack.c.l.b16 %v468
    %v512 = vunpack.c.l.b16 %v469
    %v513 = vunpack.c.l.b16 %v470
    %v514 = vunpack.c.l.b16 %v471
    %v515 = vunpack.c.l.b16 %v472
    %v516 = vunpack.c.l.b16 %v473
    %v517 = vunpack.c.l.b16 %v474
    %v518 = vunpack.c.l.b16 %v475
    %v519 = vunpack.c.l.b16 %v476
    %v520 = vpack.c.b16 %v505, %v504
    %v521 = vpack.c.b16 %v507, %v506
    %v522 = vpack.c.b16 %v509, %v508
    %v523 = vpack.c.b16 %v511, %v510
    %v524 = vpack.c.b16 %v513, %v512
    %v525 = vpack.c.b16 %v515, %v514
    %v526 = vpack.c.b16 %v517, %v516
    %v527 = vpack.c.b16 %v519, %v518
    %v532 = vunpack.c.l.b16 %v477
    %v533 = vunpack.c.l.b16 %v478
    %v534 = vunpack.c.l.b16 %v479
    %v535 = vunpack.c.l.b16 %v480
    %v536 = vpack.c.b16 %v533, %v532
    %v537 = vpack.c.b16 %v535, %v534
    %vm540 = vcmask 261120
    %v542 = vsel %vm540, %v520, 0
    %v545 = vsel %vm540, %v521, 0
    %v548 = vsel %vm540, %v522, 0
    %v551 = vsel %vm540, %v523, 0
    %v554 = vsel %vm540, %v524, 0
    %v557 = vsel %vm540, %v525, 0
    %v560 = vsel %vm540, %v526, 0
    %v563 = vsel %vm540, %v527, 0
    %565 = vmatprep.subr.bf16.mxu0 0
    %566 = vmatpush1.bf16.msra.mxu0 0
    %567 = vmatprep.subr.bf16.mxu0 0
    %568 = vmatpush1.bf16.msra.mxu0 0
    %569 = vmatprep.subr.bf16.mxu0 0
    %570 = vmatpush1.bf16.msra.mxu0 0
    %571 = vmatprep.subr.bf16.mxu0 0
    %572 = vmatpush1.bf16.msra.mxu0 0
    %573 = vmatprep.subr.bf16.mxu0 0
    %574 = vmatpush1.bf16.msra.mxu0 0
    %575 = vmatprep.subr.bf16.mxu0 0
    %576 = vmatpush1.bf16.msra.mxu0 0
    %577 = vmatprep.subr.bf16.mxu0 0
    %578 = vmatpush1.bf16.msra.mxu0 %v537
    %579 = vmatprep.subr.bf16.mxu0 0
    %580 = vmatpush1.bf16.msra.mxu0 %v536
    %581 = vmatprep.subr.bf16.mxu0 0
    %582 = vmatpush2.bf16.msra.mxu0 0
    %583 = vmatprep.subr.bf16.mxu0 0
    %584 = vmatpush2.bf16.msra.mxu0 0
    %585 = vmatprep.subr.bf16.mxu0 0
    %586 = vmatpush2.bf16.msra.mxu0 0
    %587 = vmatprep.subr.bf16.mxu0 0
    %588 = vmatpush2.bf16.msra.mxu0 0
    %589 = vmatprep.subr.bf16.mxu0 0
    %590 = vmatpush2.bf16.msra.mxu0 0
    %591 = vmatprep.subr.bf16.mxu0 0
    %592 = vmatpush2.bf16.msra.mxu0 0
    %593 = vmatprep.subr.bf16.mxu0 0
    %594 = vmatpush2.bf16.msra.mxu0 0
    %595 = vmatprep.subr.bf16.mxu0 0
    %596 = vmatpush2.bf16.msra.mxu0 0
    %597 = vmatprep.mubr.bf16.mxu0 0
    %598 = vmatmul.mubr.bf16.gmra.mxu0 %v542
    %v599 = vpop.f32.mrf.mxu0
    %v600 = vadd.f32 %v486, %v599
    %v601 = vpop.f32.mrf.mxu0
    %v602 = vpop.f32.mrf.mxu0
    %v603 = vadd.f32 %v486, %v602
    %v604 = vpop.f32.mrf.mxu0
    %605 = vmatprep.mubr.bf16.mxu0 0
    %606 = vmatmul.mubr.bf16.gmra.mxu0 %v545
    %v607 = vpop.f32.mrf.mxu0
    %v608 = vadd.f32 %v486, %v607
    %v609 = vpop.f32.mrf.mxu0
    %v610 = vpop.f32.mrf.mxu0
    %v611 = vadd.f32 %v486, %v610
    %v612 = vpop.f32.mrf.mxu0
    %613 = vmatprep.mubr.bf16.mxu0 0
    %614 = vmatmul.mubr.bf16.gmra.mxu0 %v548
    %v615 = vpop.f32.mrf.mxu0
    %v616 = vadd.f32 %v486, %v615
    %v617 = vpop.f32.mrf.mxu0
    %v618 = vpop.f32.mrf.mxu0
    %v619 = vadd.f32 %v486, %v618
    %v620 = vpop.f32.mrf.mxu0
    %621 = vmatprep.mubr.bf16.mxu0 0
    %622 = vmatmul.mubr.bf16.gmra.mxu0 %v551
    %v623 = vpop.f32.mrf.mxu0
    %v624 = vadd.f32 %v486, %v623
    %v625 = vpop.f32.mrf.mxu0
    %v626 = vpop.f32.mrf.mxu0
    %v627 = vadd.f32 %v486, %v626
    %v628 = vpop.f32.mrf.mxu0
    %629 = vmatprep.mubr.bf16.mxu0 0
    %630 = vmatmul.mubr.bf16.gmra.mxu0 %v554
    %v631 = vpop.f32.mrf.mxu0
    %v632 = vadd.f32 %v486, %v631
    %v633 = vpop.f32.mrf.mxu0
    %v634 = vpop.f32.mrf.mxu0
    %v635 = vadd.f32 %v486, %v634
    %v636 = vpop.f32.mrf.mxu0
    %637 = vmatprep.mubr.bf16.mxu0 0
    %638 = vmatmul.mubr.bf16.gmra.mxu0 %v557
    %v639 = vpop.f32.mrf.mxu0
    %v640 = vadd.f32 %v486, %v639
    %v641 = vpop.f32.mrf.mxu0
    %v642 = vpop.f32.mrf.mxu0
    %v643 = vadd.f32 %v486, %v642
    %v644 = vpop.f32.mrf.mxu0
    %645 = vmatprep.mubr.bf16.mxu0 0
    %646 = vmatmul.mubr.bf16.gmra.mxu0 %v560
    %v647 = vpop.f32.mrf.mxu0
    %v648 = vadd.f32 %v486, %v647
    %v649 = vpop.f32.mrf.mxu0
    %v650 = vpop.f32.mrf.mxu0
    %v651 = vadd.f32 %v486, %v650
    %v652 = vpop.f32.mrf.mxu0
    %653 = vmatprep.mubr.bf16.mxu0 0
    %654 = vmatmul.mubr.bf16.gmra.mxu0 %v563
    %v655 = vpop.f32.mrf.mxu0
    %v656 = vadd.f32 %v486, %v655
    %v657 = vpop.f32.mrf.mxu0
    %v658 = vpop.f32.mrf.mxu0
    %v659 = vadd.f32 %v486, %v658
    %v660 = vpop.f32.mrf.mxu0
    %661 = vdwg.mxu0
    %662 = vst [vmem:[#allocation3] sm:$0xff] %v600
    %663 = vst [vmem:[#allocation3 + $0x8] sm:$0xff] %v603
    %664 = vst [vmem:[#allocation3 + $0x10] sm:$0xff] %v608
    %665 = vst [vmem:[#allocation3 + $0x18] sm:$0xff] %v611
    %666 = vst [vmem:[#allocation3 + $0x20] sm:$0xff] %v616
    %667 = vst [vmem:[#allocation3 + $0x28] sm:$0xff] %v619
    %668 = vst [vmem:[#allocation3 + $0x30] sm:$0xff] %v624
    %669 = vst [vmem:[#allocation3 + $0x38] sm:$0xff] %v627
    %670 = vst [vmem:[#allocation3 + $0x40] sm:$0xff] %v632
    %671 = vst [vmem:[#allocation3 + $0x48] sm:$0xff] %v635
    %672 = vst [vmem:[#allocation3 + $0x50] sm:$0xff] %v640
    %673 = vst [vmem:[#allocation3 + $0x58] sm:$0xff] %v643
    %674 = vst [vmem:[#allocation3 + $0x60] sm:$0xff] %v648
    %675 = vst [vmem:[#allocation3 + $0x68] sm:$0xff] %v651
    %676 = vst [vmem:[#allocation3 + $0x70] sm:$0xff] %v656
    %677 = vst [vmem:[#allocation3 + $0x78] sm:$0xff] %v659
    // Predicated region
    $region30: #{tpu_custom_call.1} parent=1 // pred_check
      _
    $region31: #{tpu_custom_call.1} parent=1 // pred_check_branch
      %679 = sbr.rel (0) target = $region33
    $region32: #{tpu_custom_call.1} parent=1 // pred_region
      %s681 = ssub.s32 2048, 2048
      %682 = vsyncadd [#allocation4], %s681
      %s683 = sshll.u32 [#allocation3], 4
      %s684 = int_to_ptr.vmem [resolvable:$true] %s683
      %689 = dma.vmem_to_hbm [thread:$0]  %s684, 2048, %s6, [#allocation4], 128, 128, 8
    $region33: #{tpu_custom_call.1} parent=1 // pred_fallthru
      _
    // Predicated region
    $region34: #{tpu_custom_call.1} parent=1 // pred_check
      _
    $region35: #{tpu_custom_call.1} parent=1 // pred_check_branch
      %691 = sbr.rel (0) target = $region37
    $region36: #{tpu_custom_call.1} parent=1 // pred_region
      %692 = dma.done [#allocation4], 2048
    $region37: #{tpu_custom_call.1} parent=1 // pred_fallthru
      _
    %693 = vsyncpa [#allocation4], 1

</llo_original>
